<compile_context>
chip_gen: v7x
topology: tpu7x:2x2x1
jax: 0.10.0
libtpu: 0.0.40
codegen_flags: <defaults>
</compile_context>

<pallas_src>
import functools

import jax
import jax.numpy as jnp
from jax import lax
from jax.experimental import pallas as pl
from jax.experimental.pallas import tpu as pltpu

_PAD_LABEL = jnp.iinfo(jnp.int32).min  # sentinel label for padded anchor rows


def _supcon_kernel(*refs, temperature, base_temperature, bsz, n_views,
                   scale_mode):
    if scale_mode is None:
        anchor_ref, contrast_ref, a_lab_ref, c_lab_ref, out_ref = refs
        scale_ref = None
    else:
        anchor_ref, contrast_ref, a_lab_ref, c_lab_ref, scale_ref, out_ref = refs

    j = pl.program_id(0)          # sample-tile index (within one view)
    v = pl.program_id(1)          # anchor view index
    tb = anchor_ref.shape[0]
    n = contrast_ref.shape[0]

    anchor = anchor_ref[...]      # [TB, D]  (1/temperature already folded in)
    contrast = contrast_ref[...]  # [N, D]

    # anchor @ contrast.T without an explicit transpose (contract last dims);
    # bf16 inputs stay bf16 into the MXU, accumulation in f32.
    logits = lax.dot_general(
        anchor, contrast,
        dimension_numbers=(((1,), (1,)), ((), ())),
        preferred_element_type=jnp.float32)                      # [TB, N]

    # Row max over the FULL row (including the diagonal) -- matches PyTorch.
    # (Forward only; a custom_vjp would need stop_gradient here, like .detach().)
    logits = logits - jnp.max(logits, axis=1, keepdims=True)

    if scale_mode == 'compact':
        # Un-replicated [TB, bsz] block (bsz lane-aligned): tile columns over
        # the n_views views with an aligned concatenate.
        s = scale_ref[...]
        scale_full = jnp.concatenate([s] * n_views, axis=1) if n_views > 1 else s
        logits = logits * scale_full
    elif scale_mode == 'cols':
        # Column-replicated [TB, N] block (rows still un-replicated).
        logits = logits * scale_ref[...]

    # Self-contrast diagonal: global anchor row v*bsz + j*tb + r == column.
    col = lax.broadcasted_iota(jnp.int32, (tb, n), 1)
    row_ids = lax.broadcasted_iota(jnp.int32, (tb, 1), 0) + (v * bsz + j * tb)
    diag = col == row_ids                                        # [TB, N]

    # Positive-pair mask rebuilt from tiny label vectors (no [A, N] HBM mask).
    a_lab = a_lab_ref[...]        # [TB, 1] int32 (_PAD_LABEL on padded rows)
    c_lab = c_lab_ref[...]        # [1, N]  int32
    pos_f = jnp.logical_and(a_lab == c_lab,
                            jnp.logical_not(diag)).astype(jnp.float32)

    # Softmax denominator with the self-contrast term excluded.
    exp_l = jnp.where(diag, 0.0, jnp.exp(logits))
    denom = jnp.sum(exp_l, axis=1, keepdims=True)

    n_pos = jnp.sum(pos_f, axis=1, keepdims=True)
    pos_logit_sum = jnp.sum(pos_f * logits, axis=1, keepdims=True)
    n_pos_safe = jnp.where(n_pos < 1e-6, 1.0, n_pos)
    # Fused epilogue: sum(pos * (logits - log(denom))) / n_pos,
    # without materializing a [TB, N] log_prob temporary.
    mean_log_prob_pos = (pos_logit_sum - n_pos * jnp.log(denom)) / n_pos_safe

    out_ref[...] = (-(temperature / base_temperature) * mean_log_prob_pos
                    ).astype(out_ref.dtype)


def _round_up(x, m):
    return ((x + m - 1) // m) * m


def supcon_loss(features, labels=None, scale_factors=None,
                temperature=0.07, contrast_mode='all', base_temperature=0.07,
                block_b=128, compute_dtype=jnp.bfloat16):
    """Pallas implementation of SupConLoss.forward.

    features:      [bsz, n_views, ...]
    labels:        optional [bsz] int class labels
    scale_factors: optional [bsz, bsz] logit scale
    compute_dtype: dtype fed to the MXU (accumulation is always f32);
                   None keeps features.dtype.
    """
    if features.ndim < 3:
        raise ValueError('`features` needs to be [bsz, n_views, ...]')
    if features.ndim > 3:
        features = features.reshape(features.shape[0], features.shape[1], -1)

    bsz, n_views, dim = features.shape
    if compute_dtype is None:
        compute_dtype = features.dtype
    compute_dtype = jnp.dtype(compute_dtype)

    # F.normalize(dim=-1) once, in f32.  1/temperature is folded into the
    # anchor copy so the kernel never multiplies the [TB, N] logits by it.
    f32 = features.astype(jnp.float32)
    inv_norm = 1.0 / jnp.maximum(
        jnp.sqrt(jnp.sum(f32 * f32, axis=-1, keepdims=True)), 1e-12)
    feats_c = (f32 * inv_norm).astype(compute_dtype)                   # contrast
    feats_a = (f32 * (inv_norm / temperature)).astype(compute_dtype)   # anchor

    # torch.cat(torch.unbind(features, dim=1), dim=0): view-major stacking.
    contrast_feature = jnp.transpose(feats_c, (1, 0, 2)).reshape(n_views * bsz, dim)

    if contrast_mode == 'one':
        anchor3 = jnp.transpose(feats_a[:, :1], (1, 0, 2))    # [1, bsz, D]
        anchor_count = 1
    elif contrast_mode == 'all':
        anchor3 = jnp.transpose(feats_a, (1, 0, 2))           # [n_views, bsz, D]
        anchor_count = n_views
    else:
        raise ValueError(f'Unknown mode: {contrast_mode}')

    N = n_views * bsz

    # Label vectors (eye(bsz) mask == label-equality on arange(bsz)).
    if labels is not None:
        labels = jnp.asarray(labels).reshape(-1)
        if labels.shape[0] != bsz:
            raise ValueError('Num of labels does not match num of features')
        labels = labels.astype(jnp.int32)
    else:
        labels = jnp.arange(bsz, dtype=jnp.int32)

    # ---- tiling over the per-view sample axis --------------------------------
    sub = 16 if compute_dtype.itemsize < 4 else 8     # min sublane tile
    tb = min(block_b, _round_up(bsz, sub))
    # Guarantee >= 2 grid steps when possible (v7x megacore sharding).
    if anchor_count * pl.cdiv(bsz, tb) < 2 and bsz > sub:
        tb = _round_up(pl.cdiv(bsz, 2), sub)
    bsz_pad = _round_up(bsz, tb)
    n_j = bsz_pad // tb
    A_pad = anchor_count * bsz_pad

    if bsz_pad != bsz:
        anchor3 = jnp.pad(anchor3, ((0, 0), (0, bsz_pad - bsz), (0, 0)))
    anchor_feature = anchor3.reshape(A_pad, dim)

    lab_pad = jnp.pad(labels, (0, bsz_pad - bsz), constant_values=_PAD_LABEL)
    anchor_labels = jnp.tile(lab_pad, anchor_count).reshape(A_pad, 1)
    contrast_labels = jnp.tile(labels, n_views).reshape(1, N)

    in_specs = [
        pl.BlockSpec((tb, dim), lambda j, v: (v * n_j + j, 0)),     # anchor tile
        pl.BlockSpec((N, dim), lambda j, v: (0, 0),
                     pipeline_mode=pl.Buffered(1)),                 # contrast (resident)
        pl.BlockSpec((tb, 1), lambda j, v: (v * n_j + j, 0)),       # anchor labels
        pl.BlockSpec((1, N), lambda j, v: (0, 0),
                     pipeline_mode=pl.Buffered(1)),                 # contrast labels
    ]
    args = [anchor_feature, contrast_feature, anchor_labels, contrast_labels]

    scale_mode = None
    scale_bytes = 0
    if scale_factors is not None:
        scale = jnp.asarray(scale_factors, jnp.float32)             # [bsz, bsz]
        if bsz % 128 == 0:
            # Fully un-replicated compact form; columns tiled in-kernel
            # (lane-aligned concatenate).
            scale_mode = 'compact'
        else:
            # Replicate columns only (rows never replicated / re-streamed).
            scale_mode = 'cols'
            scale = jnp.tile(scale, (1, n_views))                   # [bsz, N]
        if bsz_pad != bsz:
            scale = jnp.pad(scale, ((0, bsz_pad - bsz), (0, 0)),
                            constant_values=1.0)
        scale_bytes = scale.size * 4
        # Row-blocked by the (outer) sample-tile axis; constant across the
        # inner view axis, so each row block is DMA'd only once.
        in_specs.append(
            pl.BlockSpec((tb, scale.shape[1]), lambda j, v: (j, 0)))
        args.append(scale)

    kernel = functools.partial(
        _supcon_kernel, temperature=float(temperature),
        base_temperature=float(base_temperature), bsz=bsz, n_views=n_views,
        scale_mode=scale_mode)

    itemsize = compute_dtype.itemsize
    cost = pl.CostEstimate(
        flops=2 * A_pad * N * dim + 8 * A_pad * N,
        transcendentals=A_pad * N + A_pad,
        bytes_accessed=(A_pad * dim * itemsize + N * dim * itemsize
                        + (A_pad + N) * 4 + scale_bytes + A_pad * 4))

    per_row = pl.pallas_call(
        kernel,
        out_shape=jax.ShapeDtypeStruct((A_pad, 1), jnp.float32),
        grid=(n_j, anchor_count),
        in_specs=in_specs,
        out_specs=pl.BlockSpec((tb, 1), lambda j, v: (v * n_j + j, 0)),
        compiler_params=pltpu.CompilerParams(
            dimension_semantics=("parallel", "parallel"),
            vmem_limit_bytes=48 * 1024 * 1024),
        cost_estimate=cost,
    )(*args)

    # Drop per-view padding rows; mean == PyTorch loss.view(ac, bsz).mean().
    return jnp.mean(per_row.reshape(anchor_count, bsz_pad)[:, :bsz])


def _supcon_loss_ref(features, labels=None, scale_factors=None,
                     temperature=0.07, contrast_mode='all',
                     base_temperature=0.07, compute_dtype=jnp.float32):
    """Pure-JAX reference mirroring the PyTorch forward."""
    feats = features.astype(jnp.float32)
    feats = feats / jnp.maximum(
        jnp.linalg.norm(feats, axis=-1, keepdims=True), 1e-12)
    feats = feats.astype(compute_dtype).astype(jnp.float32)
    bsz, n_views, dim = feats.shape
    cf = jnp.transpose(feats, (1, 0, 2)).reshape(n_views * bsz, dim)
    if contrast_mode == 'one':
        af = feats[:, 0]
        anchor_count = 1
    else:
        af = cf
        anchor_count = n_views
    A, N = af.shape[0], cf.shape[0]
    logits = (af @ cf.T) / temperature
    logits = logits - jnp.max(logits, axis=1, keepdims=True)
    if scale_factors is not None:
        logits = logits * jnp.tile(scale_factors.astype(jnp.float32),
                                   (anchor_count, n_views))
    if labels is not None:
        lbl = labels.reshape(-1, 1)
        mask = (lbl == lbl.T).astype(jnp.float32)
    else:
        mask = jnp.eye(bsz, dtype=jnp.float32)
    mask = jnp.tile(mask, (anchor_count, n_views))
    logits_mask = 1.0 - jnp.eye(A, N, dtype=jnp.float32)
    mask = mask * logits_mask
    exp_logits = jnp.exp(logits) * logits_mask
    log_prob = logits - jnp.log(jnp.sum(exp_logits, axis=1, keepdims=True))
    mpp = jnp.sum(mask, axis=1)
    mpp = jnp.where(mpp < 1e-6, 1.0, mpp)
    mlpp = jnp.sum(mask * log_prob, axis=1) / mpp
    return jnp.mean(-(temperature / base_temperature) * mlpp)


if __name__ == "__main__":
    key = jax.random.PRNGKey(0)
    k1, k2, k3, k4, k5 = jax.random.split(key, 5)

    # Case 1: supervised, contrast_mode='all', exact f32 path.
    feats = jax.random.normal(k1, (8, 2, 32), dtype=jnp.float32)
    labels = jax.random.randint(k2, (8,), 0, 3, dtype=jnp.int32)
    out = jax.block_until_ready(
        supcon_loss(feats, labels=labels, compute_dtype=jnp.float32))
    ref = _supcon_loss_ref(feats, labels=labels)
    assert jnp.allclose(out, ref, rtol=1e-3, atol=1e-3), (out, ref)

    # Case 2: unsupervised (SimCLR), batch not a multiple of 8 (padding path).
    feats2 = jax.random.normal(k3, (5, 2, 32), dtype=jnp.float32)
    out2 = jax.block_until_ready(supcon_loss(feats2, compute_dtype=jnp.float32))
    ref2 = _supcon_loss_ref(feats2)
    assert jnp.allclose(out2, ref2, rtol=1e-3, atol=1e-3), (out2, ref2)

    # Case 3: scale_factors with lane-unaligned bsz (column-replicated scale
    # path) and a small block to force a multi-tile sample axis.
    bsz3, dim3 = 24, 64
    feats3 = jax.random.normal(k4, (bsz3, 2, dim3), dtype=jnp.float32)
    labels3 = jax.random.randint(k2, (bsz3,), 0, 5, dtype=jnp.int32)
    scale3 = 1.0 + 0.1 * jax.random.normal(k1, (bsz3, bsz3), dtype=jnp.float32)
    out3 = jax.block_until_ready(
        supcon_loss(feats3, labels=labels3, scale_factors=scale3,
                    compute_dtype=jnp.float32, block_b=8))
    ref3 = _supcon_loss_ref(feats3, labels=labels3, scale_factors=scale3)
    assert jnp.allclose(out3, ref3, rtol=1e-3, atol=1e-3), (out3, ref3)

    # Case 4: scale_factors with bsz % 128 == 0 (compact un-replicated scale).
    bsz4, dim4 = 128, 32
    feats4 = jax.random.normal(k5, (bsz4, 2, dim4), dtype=jnp.float32)
    labels4 = jax.random.randint(k2, (bsz4,), 0, 10, dtype=jnp.int32)
    scale4 = 1.0 + 0.1 * jax.random.normal(k3, (bsz4, bsz4), dtype=jnp.float32)
    out4 = jax.block_until_ready(
        supcon_loss(feats4, labels=labels4, scale_factors=scale4,
                    compute_dtype=jnp.float32))
    ref4 = _supcon_loss_ref(feats4, labels=labels4, scale_factors=scale4)
    assert jnp.allclose(out4, ref4, rtol=1e-3, atol=1e-3), (out4, ref4)

    # Case 5: contrast_mode='one'.
    out5 = jax.block_until_ready(
        supcon_loss(feats, labels=labels, contrast_mode='one',
                    compute_dtype=jnp.float32))
    ref5 = _supcon_loss_ref(feats, labels=labels, contrast_mode='one')
    assert jnp.allclose(out5, ref5, rtol=1e-3, atol=1e-3), (out5, ref5)

    # Case 6: default bf16 compute path (HBM/MXU-optimized), looser tolerance.
    out6 = jax.block_until_ready(supcon_loss(feats, labels=labels))
    ref6 = _supcon_loss_ref(feats, labels=labels, compute_dtype=jnp.bfloat16)
    assert jnp.allclose(out6, ref6, rtol=5e-2, atol=5e-2), (out6, ref6)

    print("KERNEL_OK")
</pallas_src>

<mosaic_0001>
module attributes {stable_mosaic.version = 11 : i64} {
  func.func @_supcon_kernel(%arg0: i32, %arg1: i32, %arg2: memref<8x32xf32, #tpu.memory_space<vmem>>, %arg3: memref<16x32xf32, #tpu.memory_space<vmem>>, %arg4: memref<8x1xi32, #tpu.memory_space<vmem>>, %arg5: memref<1x16xi32, #tpu.memory_space<vmem>>, %arg6: memref<8x1xf32, #tpu.memory_space<vmem>>) attributes {dimension_semantics = [#tpu.dimension_semantics<parallel>, #tpu.dimension_semantics<parallel>], iteration_bounds = array<i64: 1, 2>, scalar_prefetch = 0 : i64, scratch_operands = 0 : i64, tpu.core_type = #tpu.core_type<tc>, window_params = [{transform_indices = @transform_0, window_bounds = array<i64: 8, 32>}, {pipeline_mode = #tpu.pipeline_mode<synchronous>, transform_indices = @transform_1, window_bounds = array<i64: 16, 32>}, {transform_indices = @transform_2, window_bounds = array<i64: 8, 1>}, {pipeline_mode = #tpu.pipeline_mode<synchronous>, transform_indices = @transform_3, window_bounds = array<i64: 1, 16>}, {transform_indices = @transform_4, window_bounds = array<i64: 8, 1>}]} {
    %c0 = arith.constant 0 : index
    %c0_0 = arith.constant 0 : index
    %0 = vector.load %arg2[%c0, %c0_0] : memref<8x32xf32, #tpu.memory_space<vmem>>, vector<8x32xf32>
    %c0_1 = arith.constant 0 : index
    %c0_2 = arith.constant 0 : index
    %1 = vector.load %arg3[%c0_1, %c0_2] : memref<16x32xf32, #tpu.memory_space<vmem>>, vector<16x32xf32>
    %cst = arith.constant dense<0.000000e+00> : vector<8x16xf32>
    %2 = tpu.matmul %0, %1, %cst {dimension_numbers = #tpu.dot_dimension_numbers<[1], [1], [0], [0], [0, 0, 1, 0], [], []>} : vector<8x32xf32>, vector<16x32xf32>, vector<8x16xf32> -> vector<8x16xf32>
    %cst_3 = arith.constant dense<0xFF800000> : vector<8xf32>
    %3 = vector.multi_reduction <maximumf>, %2, %cst_3 [1] : vector<8x16xf32> to vector<8xf32>
    %4 = vector.shape_cast %3 : vector<8xf32> to vector<8x1xf32>
    %5 = vector.broadcast %4 : vector<8x1xf32> to vector<8x16xf32>
    %6 = arith.subf %2, %5 : vector<8x16xf32>
    %7 = tpu.iota {dimensions = array<i32: 1>} : vector<8x16xi32>
    %8 = tpu.iota {dimensions = array<i32: 0>} : vector<8x1xi32>
    %c8_i32 = arith.constant 8 : i32
    %9 = arith.muli %arg1, %c8_i32 : i32
    %c8_i32_4 = arith.constant 8 : i32
    %10 = arith.muli %arg0, %c8_i32_4 : i32
    %11 = arith.addi %9, %10 : i32
    %12 = vector.broadcast %11 : i32 to vector<8x1xi32>
    %13 = arith.addi %8, %12 : vector<8x1xi32>
    %14 = vector.broadcast %13 : vector<8x1xi32> to vector<8x16xi32>
    %15 = arith.cmpi eq, %7, %14 : vector<8x16xi32>
    %c0_5 = arith.constant 0 : index
    %c0_6 = arith.constant 0 : index
    %16 = vector.load %arg4[%c0_5, %c0_6] : memref<8x1xi32, #tpu.memory_space<vmem>>, vector<8x1xi32>
    %c0_7 = arith.constant 0 : index
    %c0_8 = arith.constant 0 : index
    %17 = vector.load %arg5[%c0_7, %c0_8] : memref<1x16xi32, #tpu.memory_space<vmem>>, vector<1x16xi32>
    %18 = vector.broadcast %16 : vector<8x1xi32> to vector<8x16xi32>
    %19 = vector.broadcast %17 : vector<1x16xi32> to vector<8x16xi32>
    %20 = arith.cmpi eq, %18, %19 : vector<8x16xi32>
    %cst_9 = arith.constant dense<true> : vector<8x16xi1>
    %21 = arith.xori %15, %cst_9 : vector<8x16xi1>
    %22 = arith.andi %20, %21 : vector<8x16xi1>
    %23 = arith.extui %22 : vector<8x16xi1> to vector<8x16xi32>
    %24 = arith.sitofp %23 : vector<8x16xi32> to vector<8x16xf32>
    %25 = math.exp %6 : vector<8x16xf32>
    %cst_10 = arith.constant 0.000000e+00 : f32
    %26 = vector.broadcast %cst_10 : f32 to vector<8x16xf32>
    %27 = arith.select %15, %26, %25 : vector<8x16xi1>, vector<8x16xf32>
    %cst_11 = arith.constant dense<0.000000e+00> : vector<8xf32>
    %28 = vector.multi_reduction <add>, %27, %cst_11 [1] : vector<8x16xf32> to vector<8xf32>
    %29 = vector.shape_cast %28 : vector<8xf32> to vector<8x1xf32>
    %cst_12 = arith.constant dense<0.000000e+00> : vector<8xf32>
    %30 = vector.multi_reduction <add>, %24, %cst_12 [1] : vector<8x16xf32> to vector<8xf32>
    %31 = vector.shape_cast %30 : vector<8xf32> to vector<8x1xf32>
    %32 = arith.mulf %24, %6 : vector<8x16xf32>
    %cst_13 = arith.constant dense<0.000000e+00> : vector<8xf32>
    %33 = vector.multi_reduction <add>, %32, %cst_13 [1] : vector<8x16xf32> to vector<8xf32>
    %34 = vector.shape_cast %33 : vector<8xf32> to vector<8x1xf32>
    %cst_14 = arith.constant 9.99999997E-7 : f32
    %35 = vector.broadcast %cst_14 : f32 to vector<8x1xf32>
    %36 = arith.cmpf olt, %31, %35 : vector<8x1xf32>
    %cst_15 = arith.constant 1.000000e+00 : f32
    %37 = vector.broadcast %cst_15 : f32 to vector<8x1xf32>
    %38 = arith.select %36, %37, %31 : vector<8x1xi1>, vector<8x1xf32>
    %39 = math.log %29 : vector<8x1xf32>
    %40 = arith.mulf %31, %39 : vector<8x1xf32>
    %41 = arith.subf %34, %40 : vector<8x1xf32>
    %42 = arith.divf %41, %38 : vector<8x1xf32>
    %cst_16 = arith.constant -1.000000e+00 : f32
    %43 = vector.broadcast %cst_16 : f32 to vector<8x1xf32>
    %44 = arith.mulf %43, %42 : vector<8x1xf32>
    %c0_17 = arith.constant 0 : index
    %c0_18 = arith.constant 0 : index
    %45 = vector.load %arg6[%c0_17, %c0_18] : memref<8x1xf32, #tpu.memory_space<vmem>>, vector<8x1xf32>
    tpu.vector_store %arg6[%c0_17, %c0_18], %44 {strides = array<i32>} : memref<8x1xf32, #tpu.memory_space<vmem>>, vector<8x1xf32>,
    return
  }
  func.func @transform_0(%arg0: i32, %arg1: i32) -> (i32, i32) {
    %c1_i32 = arith.constant 1 : i32
    %0 = arith.muli %arg1, %c1_i32 : i32
    %1 = arith.addi %0, %arg0 : i32
    %c0_i32 = arith.constant 0 : i32
    %c0_i32_0 = arith.constant 0 : i32
    return %1, %c0_i32 : i32, i32
  }
  func.func @transform_1(%arg0: i32, %arg1: i32) -> (i32, i32) {
    %c0_i32 = arith.constant 0 : i32
    %c0_i32_0 = arith.constant 0 : i32
    %c0_i32_1 = arith.constant 0 : i32
    return %c0_i32, %c0_i32_0 : i32, i32
  }
  func.func @transform_2(%arg0: i32, %arg1: i32) -> (i32, i32) {
    %c1_i32 = arith.constant 1 : i32
    %0 = arith.muli %arg1, %c1_i32 : i32
    %1 = arith.addi %0, %arg0 : i32
    %c0_i32 = arith.constant 0 : i32
    %c0_i32_0 = arith.constant 0 : i32
    return %1, %c0_i32 : i32, i32
  }
  func.func @transform_3(%arg0: i32, %arg1: i32) -> (i32, i32) {
    %c0_i32 = arith.constant 0 : i32
    %c0_i32_0 = arith.constant 0 : i32
    %c0_i32_1 = arith.constant 0 : i32
    return %c0_i32, %c0_i32_0 : i32, i32
  }
  func.func @transform_4(%arg0: i32, %arg1: i32) -> (i32, i32) {
    %c1_i32 = arith.constant 1 : i32
    %0 = arith.muli %arg1, %c1_i32 : i32
    %1 = arith.addi %0, %arg0 : i32
    %c0_i32 = arith.constant 0 : i32
    %c0_i32_0 = arith.constant 0 : i32
    return %1, %c0_i32 : i32, i32
  }
}

</mosaic_0001>

<llo_original>
// kernel: tpu_custom_call.1
$region0: #{tpu_custom_call.1}
  #allocation0 [shape = 'u32[]', space=smem, size = 0x4, offset = 0x4, fixed_abs, tag = 'smem constant byte address 0x4 - core index']
  #allocation1 [shape = 'u32[144,128]{1,0:T(1,128)}', space=vmem, size = 0x12000, scoped, tag = 'internal scratch']
  %s0 = inlined_call_operand.vmem [shape: f32[16,32], index: 0, kind: input, shape index: {}]
  %s1 = inlined_call_operand.hbm [shape: f32[16,32], index: 1, kind: input, shape index: {}]
  %s2 = inlined_call_operand.vmem [shape: s32[16,1], index: 2, kind: input, shape index: {}]
  %s3 = inlined_call_operand.vmem [shape: s32[1,16], index: 3, kind: input, shape index: {}]
  %s4 = inlined_call_operand.vmem [shape: f32[16,1], index: 4, kind: output, shape index: {}]
  %s5 = sld [smem:[#allocation0]]
  $region53: #{tpu_custom_call.1} parent=0
    _
  %s7 = ssub.s32 1, %s5
  %s8 = scalar_select 0, %s7, %s5
  $region1: #{tpu_custom_call.1} parent=0
    #allocation2 [shape = 'u8[8192]{0}', space=vmem, size = 0x2000, scoped, tag = 'input window, operand 1, single buffered']
    #allocation3 [shape = 's32[2]{0}', space=sflag, size = 0x8, scoped, tag = 'scoped memory for tpu_custom_call.1']
    %9 = vsyncpa [#allocation3], 0
    loop: start=0, step=1, limit=4
    $region2: #{tpu_custom_call.1} parent=1 // loop_pre_header
      _
    $region3: #{tpu_custom_call.1} parent=1 // loop_header
      %s11 = sphi 0, %s15
      %p12 = scmp.ge.s32.totalorder %s11, 4
      %s18 = sphi 0, %s30
      %s19 = sphi 0, %s26
      %s20 = sphi 0, %s18
      %s21 = sphi 0, %s19
      %s22 = sphi 0, %s20
      %s23 = sphi 0, %s21
      %s35 = sphi 0, %s37
      %s38 = sphi 0, %s35
      %s39 = sphi 0, %s38
      %s55 = sphi 0, %s39
      %s59 = sphi 0, %s59
      %s61 = sphi 0, %s59
      %s62 = sphi 0, %s61
      %s76 = sphi 0, %s62
      %s84 = sphi 0, %s86
      %s87 = sphi 0, %s84
      %s88 = sphi 0, %s87
      %s104 = sphi 0, %s88
      %s108 = sphi 0, %s108
      %s110 = sphi 0, %s108
      %s111 = sphi 0, %s110
      %s125 = sphi 0, %s111
      %s133 = sphi 0, %s135
      %s136 = sphi 0, %s133
      %s137 = sphi 0, %s136
      %s153 = sphi 0, %s137
    $region4: #{tpu_custom_call.1} parent=1 // loop_header_branch
      %14 = sbr.rel (%p12) target = $region8
    $region5: #{tpu_custom_call.1} parent=1 // loop_body
      %s16 = ssub.s32 %s11, 1
      %s17 = ssub.s32 %s11, 2
      %s24 = sadd.s32 1, %s19
      %p25 = scmp.ge.s32.totalorder %s24, 2
      %s26 = scalar_select %p25, 0, %s24
      %s27 = sadd.s32 1, %s18
      %s28 = scalar_select %p25, %s27, %s18
      %p29 = scmp.ge.s32.totalorder %s28, 1
      %s30 = scalar_select %p29, 0, %s28
      %s31 = sadd.s32 %s19, %s18
      %s32 = sadd.s32 %s26, %s30
      %s33 = ssub.s32 %s31, %s32
      %p34 = scmp.eq.s32.totalorder %s33, 0
      %s36 = sadd.s32 %s35, 1
      %s37 = scalar_select %p34, %s35, %s36
      %p40 = pneg %p34
      %p41 = scmp.eq.s32.totalorder %s11, 1
      %p42 = por %p40, %p41
      %p43 = scmp.ne.s32.totalorder %s35, %s38
      %p44 = scmp.eq.s32.totalorder %s11, 0
      %p45 = por %p43, %p44
      %p46 = scmp.ne.s32.totalorder %s35, %s38
      %p47 = scmp.eq.s32.totalorder %s16, 1
      %p48 = por %p46, %p47
      %p49 = scmp.ne.s32.totalorder %s38, %s39
      %p50 = scmp.eq.s32.totalorder %s16, 0
      %p51 = por %p49, %p50
      %p52 = scmp.ne.s32.totalorder %s38, %s39
      %p53 = scmp.eq.s32.totalorder %s17, 1
      %p54 = por %p52, %p53
      %p56 = scmp.ne.s32.totalorder %s39, %s55
      %p57 = scmp.eq.s32.totalorder %s17, 0
      %p58 = por %p56, %p57
      %s60 = sadd.s32 %s59, 1
      %p63 = scmp.eq.s32.totalorder %s11, 1
      %p64 = scmp.ne.s32.totalorder %s59, %s61
      %p65 = scmp.eq.s32.totalorder %s11, 0
      %p66 = por %p64, %p65
      %p67 = scmp.ne.s32.totalorder %s59, %s61
      %p68 = scmp.eq.s32.totalorder %s16, 1
      %p69 = por %p67, %p68
      %p70 = scmp.ne.s32.totalorder %s61, %s62
      %p71 = scmp.eq.s32.totalorder %s16, 0
      %p72 = por %p70, %p71
      %p73 = scmp.ne.s32.totalorder %s61, %s62
      %p74 = scmp.eq.s32.totalorder %s17, 1
      %p75 = por %p73, %p74
      %p77 = scmp.ne.s32.totalorder %s62, %s76
      %p78 = scmp.eq.s32.totalorder %s17, 0
      %p79 = por %p77, %p78
      %s80 = sadd.s32 %s19, %s18
      %s81 = sadd.s32 %s26, %s30
      %s82 = ssub.s32 %s80, %s81
      %p83 = scmp.eq.s32.totalorder %s82, 0
      %s85 = sadd.s32 %s84, 1
      %s86 = scalar_select %p83, %s84, %s85
      %p89 = pneg %p83
      %p90 = scmp.eq.s32.totalorder %s11, 1
      %p91 = por %p89, %p90
      %p92 = scmp.ne.s32.totalorder %s84, %s87
      %p93 = scmp.eq.s32.totalorder %s11, 0
      %p94 = por %p92, %p93
      %p95 = scmp.ne.s32.totalorder %s84, %s87
      %p96 = scmp.eq.s32.totalorder %s16, 1
      %p97 = por %p95, %p96
      %p98 = scmp.ne.s32.totalorder %s87, %s88
      %p99 = scmp.eq.s32.totalorder %s16, 0
      %p100 = por %p98, %p99
      %p101 = scmp.ne.s32.totalorder %s87, %s88
      %p102 = scmp.eq.s32.totalorder %s17, 1
      %p103 = por %p101, %p102
      %p105 = scmp.ne.s32.totalorder %s88, %s104
      %p106 = scmp.eq.s32.totalorder %s17, 0
      %p107 = por %p105, %p106
      %s109 = sadd.s32 %s108, 1
      %p112 = scmp.eq.s32.totalorder %s11, 1
      %p113 = scmp.ne.s32.totalorder %s108, %s110
      %p114 = scmp.eq.s32.totalorder %s11, 0
      %p115 = por %p113, %p114
      %p116 = scmp.ne.s32.totalorder %s108, %s110
      %p117 = scmp.eq.s32.totalorder %s16, 1
      %p118 = por %p116, %p117
      %p119 = scmp.ne.s32.totalorder %s110, %s111
      %p120 = scmp.eq.s32.totalorder %s16, 0
      %p121 = por %p119, %p120
      %p122 = scmp.ne.s32.totalorder %s110, %s111
      %p123 = scmp.eq.s32.totalorder %s17, 1
      %p124 = por %p122, %p123
      %p126 = scmp.ne.s32.totalorder %s111, %s125
      %p127 = scmp.eq.s32.totalorder %s17, 0
      %p128 = por %p126, %p127
      %s129 = sadd.s32 %s19, %s18
      %s130 = sadd.s32 %s26, %s30
      %s131 = ssub.s32 %s129, %s130
      %p132 = scmp.eq.s32.totalorder %s131, 0
      %s134 = sadd.s32 %s133, 1
      %s135 = scalar_select %p132, %s133, %s134
      %p138 = pneg %p132
      %p139 = scmp.eq.s32.totalorder %s11, 1
      %p140 = por %p138, %p139
      %p141 = scmp.ne.s32.totalorder %s133, %s136
      %p142 = scmp.eq.s32.totalorder %s11, 0
      %p143 = por %p141, %p142
      %p144 = scmp.ne.s32.totalorder %s133, %s136
      %p145 = scmp.eq.s32.totalorder %s16, 1
      %p146 = por %p144, %p145
      %p147 = scmp.ne.s32.totalorder %s136, %s137
      %p148 = scmp.eq.s32.totalorder %s16, 0
      %p149 = por %p147, %p148
      %p150 = scmp.ne.s32.totalorder %s136, %s137
      %p151 = scmp.eq.s32.totalorder %s17, 1
      %p152 = por %p150, %p151
      %p154 = scmp.ne.s32.totalorder %s137, %s153
      %p155 = scmp.eq.s32.totalorder %s17, 0
      %p156 = por %p154, %p155
      %p157 = scmp.le.s32.totalorder 1, %s11
      %p158 = scmp.lt.s32.totalorder %s11, 3
      %p159 = pnand %p157, %p158
      %p160 = pneg %p159
      // Predicated region
      $region9: #{tpu_custom_call.1} parent=5 // pred_check
        _
      $region10: #{tpu_custom_call.1} parent=5 // pred_check_branch
        %162 = sbr.rel (%p159) target = $region12
      $region11: #{tpu_custom_call.1} parent=5 // pred_region
        %s163 = ssub.s32 %s11, 1
        // Predicated region
        $region13: #{tpu_custom_call.1} parent=11 // pred_check
          %p164 = pneg %p72
        $region14: #{tpu_custom_call.1} parent=11 // pred_check_branch
          %166 = sbr.rel (%p164) target = $region16
        $region15: #{tpu_custom_call.1} parent=11 // pred_region
          %s168 = ssub.s32 256, 256
          %169 = vsyncadd [#allocation3], %s168
          %s170 = sshll.u32 [#allocation2], 4
          %s171 = int_to_ptr.vmem [resolvable:$true] %s170
          %176 = dma.hbm_to_vmem [thread:$0]  %s1, 256, %s171, [#allocation3], 128, 128, 8
        $region16: #{tpu_custom_call.1} parent=11 // pred_fallthru
          _
        // Predicated region
        $region17: #{tpu_custom_call.1} parent=11 // pred_check
          %p177 = pneg %p121
        $region18: #{tpu_custom_call.1} parent=11 // pred_check_branch
          %179 = sbr.rel (%p177) target = $region20
        $region19: #{tpu_custom_call.1} parent=11 // pred_region
          _
        $region20: #{tpu_custom_call.1} parent=11 // pred_fallthru
          _
      $region12: #{tpu_custom_call.1} parent=5 // pred_fallthru
        _
      %p180 = scmp.lt.s32.totalorder %s11, 2
      // Predicated region
      $region21: #{tpu_custom_call.1} parent=5 // pred_check
        %p181 = pneg %p180
      $region22: #{tpu_custom_call.1} parent=5 // pred_check_branch
        %183 = sbr.rel (%p181) target = $region24
      $region23: #{tpu_custom_call.1} parent=5 // pred_region
        // Predicated region
        $region25: #{tpu_custom_call.1} parent=23 // pred_check
          %p184 = pneg %p45
        $region26: #{tpu_custom_call.1} parent=23 // pred_check_branch
          %186 = sbr.rel (%p184) target = $region28
        $region27: #{tpu_custom_call.1} parent=23 // pred_region
          %s187 = sadd.s32 %s19, %s18
          %p188 = scmp.lt.s32.totalorder %s187, 1
          %s189 = scalar_select %p188, %s187, 1
          %s190 = smul.addr %s189, 8
          %s191 = scalar_lea.vmem %s0, %s190
          %s192 = sadd.s32 %s19, %s18
        $region28: #{tpu_custom_call.1} parent=23 // pred_fallthru
          _
        // Predicated region
        $region29: #{tpu_custom_call.1} parent=23 // pred_check
          %p193 = pneg %p94
        $region30: #{tpu_custom_call.1} parent=23 // pred_check_branch
          %195 = sbr.rel (%p193) target = $region32
        $region31: #{tpu_custom_call.1} parent=23 // pred_region
          %s196 = sadd.s32 %s19, %s18
          %p197 = scmp.lt.s32.totalorder %s196, 1
          %s198 = scalar_select %p197, %s196, 1
          %s199 = smul.addr %s198, 8
          %s200 = scalar_lea.vmem %s2, %s199
          %s201 = sadd.s32 %s19, %s18
        $region32: #{tpu_custom_call.1} parent=23 // pred_fallthru
          _
      $region24: #{tpu_custom_call.1} parent=5 // pred_fallthru
        _
      %p202 = scmp.le.s32.totalorder 1, %s11
      %p203 = scmp.lt.s32.totalorder %s11, 3
      %p204 = pnand %p202, %p203
      %p205 = pneg %p204
      // Predicated region
      $region33: #{tpu_custom_call.1} parent=5 // pred_check
        _
      $region34: #{tpu_custom_call.1} parent=5 // pred_check_branch
        %207 = sbr.rel (%p204) target = $region36
      $region35: #{tpu_custom_call.1} parent=5 // pred_region
        %s208 = ssub.s32 %s11, 1
        // Predicated region
        $region37: #{tpu_custom_call.1} parent=35 // pred_check
          %p209 = pneg %p72
        $region38: #{tpu_custom_call.1} parent=35 // pred_check_branch
          %211 = sbr.rel (%p209) target = $region40
        $region39: #{tpu_custom_call.1} parent=35 // pred_region
          %212 = dma.done [#allocation3], 256
        $region40: #{tpu_custom_call.1} parent=35 // pred_fallthru
          _
        %s213 = sadd.s32 %s21, %s20
        %p214 = scmp.lt.s32.totalorder %s213, 1
        %s215 = scalar_select %p214, %s213, 1
        %s216 = smul.addr %s215, 8
        %s217 = scalar_lea.vmem %s0, %s216
        %p218 = pneg %p51
        %p219 = pneg %p48
        %p220 = pneg %p72
        %p221 = pneg %p69
        %s222 = sadd.s32 %s21, %s20
        %p223 = scmp.lt.s32.totalorder %s222, 1
        %s224 = scalar_select %p223, %s222, 1
        %s225 = smul.addr %s224, 8
        %s226 = scalar_lea.vmem %s2, %s225
        %p227 = pneg %p100
        %p228 = pneg %p97
        %p229 = pneg %p121
        %p230 = pneg %p118
        %p231 = pneg %p149
        %p232 = pneg %p146
        %s233 = sadd.s32 %s21, %s20
        %p234 = scmp.lt.s32.totalorder %s233, 1
        %s235 = scalar_select %p234, %s233, 1
        %s236 = smul.addr %s235, 8
        %s237 = scalar_lea.vmem %s4, %s236
        %s238 = sadd.s32 %s21, %s20
        %p239 = scmp.lt.s32.totalorder %s238, 1
        %s240 = scalar_select %p239, %s238, 1
        %s241 = smul.addr %s240, 8
        %s242 = scalar_lea.vmem %s0, %s241
        %s243 = sadd.s32 %s21, %s20
        %s244 = sadd.s32 %s21, %s20
        %p245 = scmp.lt.s32.totalorder %s244, 1
        %s246 = scalar_select %p245, %s244, 1
        %s247 = smul.addr %s246, 8
        %s248 = scalar_lea.vmem %s2, %s247
        %s249 = sadd.s32 %s21, %s20
        %s250 = sadd.s32 %s21, %s20
        %p251 = scmp.lt.s32.totalorder %s250, 1
        %s252 = scalar_select %p251, %s250, 1
        %s253 = smul.addr %s252, 8
        %s254 = scalar_lea.vmem %s4, %s253
        %s255 = sadd.s32 %s21, %s20
        %v256 = vld [vmem:[%s242] sm:$0xff]
        %v257 = vld [vmem:[#allocation2] sm:$0xff]
        %v258 = vld [vmem:[#allocation2 + $0x8] sm:$0xff]
        %vm259 = vcmask 261120
        %v261 = vsel %vm259, %v256, 0
        %v264 = vsel %vm259, %v257, 0
        %v267 = vsel %vm259, %v258, 0
        %269 = vmatprep.subr.mxu0 0.0
        %270 = vmatpush1.xpose.msra.mxu0 %v264
        %271 = vmatprep.subr.mxu0 0.0
        %272 = vmatpush1.xpose.msra.mxu0 %v267
        %273 = vmatprep.subr.mxu0 0.0
        %274 = vmatpush1.xpose.msra.mxu0 0.0
        %275 = vmatprep.subr.mxu0 0.0
        %276 = vmatpush1.xpose.msra.mxu0 0.0
        %277 = vmatprep.subr.mxu0 0.0
        %278 = vmatpush1.xpose.msra.mxu0 0.0
        %279 = vmatprep.subr.mxu0 0.0
        %280 = vmatpush1.xpose.msra.mxu0 0.0
        %281 = vmatprep.subr.mxu0 0.0
        %282 = vmatpush1.xpose.msra.mxu0 0.0
        %283 = vmatprep.subr.mxu0 0.0
        %284 = vmatpush1.xpose.msra.mxu0 0.0
        %285 = vmatprep.subr.mxu0 0.0
        %286 = vmatpush1.xpose.msra.mxu0 0.0
        %287 = vmatprep.subr.mxu0 0.0
        %288 = vmatpush1.xpose.msra.mxu0 0.0
        %289 = vmatprep.subr.mxu0 0.0
        %290 = vmatpush1.xpose.msra.mxu0 0.0
        %291 = vmatprep.subr.mxu0 0.0
        %292 = vmatpush1.xpose.msra.mxu0 0.0
        %293 = vmatprep.subr.mxu0 0.0
        %294 = vmatpush1.xpose.msra.mxu0 0.0
        %295 = vmatprep.subr.mxu0 0.0
        %296 = vmatpush1.xpose.msra.mxu0 0.0
        %297 = vmatprep.subr.mxu0 0.0
        %298 = vmatpush1.xpose.msra.mxu0 0.0
        %299 = vmatprep.subr.mxu0 0.0
        %300 = vmatpush1.xpose.msra.mxu0 0.0
        %301 = vmatprep.subr.mxu0 0.0
        %302 = vmatpush1.xpose.msra.mxu0 0.0
        %303 = vmatprep.subr.mxu0 0.0
        %304 = vmatpush1.xpose.msra.mxu0 0.0
        %305 = vmatprep.subr.mxu0 0.0
        %306 = vmatpush1.xpose.msra.mxu0 0.0
        %307 = vmatprep.subr.mxu0 0.0
        %308 = vmatpush1.xpose.msra.mxu0 0.0
        %309 = vmatprep.subr.mxu0 0.0
        %310 = vmatpush1.xpose.msra.mxu0 0.0
        %311 = vmatprep.subr.mxu0 0.0
        %312 = vmatpush1.xpose.msra.mxu0 0.0
        %313 = vmatprep.subr.mxu0 0.0
        %314 = vmatpush1.xpose.msra.mxu0 0.0
        %315 = vmatprep.subr.mxu0 0.0
        %316 = vmatpush1.xpose.msra.mxu0 0.0
        %317 = vmatprep.subr.mxu0 0.0
        %318 = vmatpush1.xpose.msra.mxu0 0.0
        %319 = vmatprep.subr.mxu0 0.0
        %320 = vmatpush1.xpose.msra.mxu0 0.0
        %321 = vmatprep.subr.mxu0 0.0
        %322 = vmatpush1.xpose.msra.mxu0 0.0
        %323 = vmatprep.subr.mxu0 0.0
        %324 = vmatpush1.xpose.msra.mxu0 0.0
        %325 = vmatprep.subr.mxu0 0.0
        %326 = vmatpush1.xpose.msra.mxu0 0.0
        %327 = vmatprep.subr.mxu0 0.0
        %328 = vmatpush1.xpose.msra.mxu0 0.0
        %329 = vmatprep.subr.mxu0 0.0
        %330 = vmatpush1.xpose.msra.mxu0 0.0
        %331 = vmatprep.subr.mxu0 0.0
        %332 = vmatpush1.xpose.msra.mxu0 0.0
        %333 = vmatprep.mubr.f32.mxu0 0.0
        %334 = vmatmul.mubr.f32.gmra.mrb[0].mxu0 %v261
        %v335 = vpop.f32.mrb[0].mxu0
        %v336 = vadd.f32 0.0, %v335
        %v337 = vpop.f32.mrb[0].mxu0
        %338 = vdwg.mxu0
        %vm339 = vcmask 130048
        %v340 = vsel %vm339, %v336, -inf
        %341 = vmax.xlane.f32.xlu0 %v340
        %v342 = vpop.xlane.xlu0 %341
        %v343 = vsub.f32 %v336, %v342
        %v344 = vlaneseq
        %v345 = vand.u32 %v344, 127
        %v346 = vlaneseq
        %v347 = vshrl.u32 %v346, 7
        %s348 = smul.u32 %s21, 8
        %s349 = smul.u32 %s20, 8
        %s350 = sadd.s32 %s348, %s349
        %v351 = vstv %s350
        %v352 = vadd.s32 %v347, %v351
        %vm353 = vcmp.eq.s32.totalorder %v345, %v352
        %v354 = vld [vmem:[%s248] sm:$0xff]
        %v355 = vld [vmem:[%s3] sm:$0x1]
        %356 = vset.pattern.permute.xlu0 0
        %357 = vperm.xlu0 %356, %v354
        %v358 = vpop.permute.xlu0 %357
        %v359 = vlaneseq
        %v360 = vshrl.u32 %v359, 7
        %v361 = vsub.s32 0, %v360
        %v362 = vrot.slane %v355, %v361
        %vm363 = vcmp.eq.s32.totalorder %v358, %v362
        %vm364 = vmxor %vm353, 1
        %vm365 = vmand %vm363, %vm364
        %v366 = vsel %vm365, 1, 0
        %v367 = vcvt.s32.f32 %v366
        %v368 = vmul.f32 %v343, 1.442695
        %v369 = vpow.pop %v368
        %v370 = vsel %vm353, 0.0, %v369
        %v371 = vsel %vm339, %v370, 0.0
        %372 = vadd.xlane.f32.xlu0 %v371
        %v373 = vpop.xlane.xlu0 %372
        %v374 = vsel %vm339, %v367, 0.0
        %375 = vadd.xlane.f32.xlu0 %v374
        %v376 = vpop.xlane.xlu0 %375
        %v377 = vmul.f32 %v367, %v343
        %v378 = vsel %vm339, %v377, 0.0
        %379 = vadd.xlane.f32.xlu0 %v378
        %v380 = vpop.xlane.xlu0 %379
        %vm381 = vcmp.lt.f32.partialorder %v376, 1e-06
        %v382 = vsel %vm381, 1.0, %v376
        %v383 = vlog2.pop %v373
        %v384 = vmul.f32 %v383, 0.6931472
        %v385 = vmul.f32 %v376, %v384
        %v386 = vsub.f32 %v380, %v385
        %v387 = vrcp.pop %v382
        %v388 = vmul.f32 %v386, %v387
        %v389 = vmul.f32 %v388, -1.0
        %vm390 = vcmask 7168
        %391 = vst.msk [vmem:[%s254] sm:$0xff] %vm390, %v389
        %s392 = sadd.s32 %s21, %s20
        %p393 = scmp.lt.s32.totalorder %s392, 1
        %s394 = scalar_select %p393, %s392, 1
        %s395 = smul.addr %s394, 8
        %s396 = scalar_lea.vmem %s4, %s395
        // Predicated region
        $region41: #{tpu_custom_call.1} parent=35 // pred_check
          %p397 = pneg %p146
        $region42: #{tpu_custom_call.1} parent=35 // pred_check_branch
          %399 = sbr.rel (%p397) target = $region44
        $region43: #{tpu_custom_call.1} parent=35 // pred_region
          %s400 = sadd.s32 %s21, %s20
        $region44: #{tpu_custom_call.1} parent=35 // pred_fallthru
          _
      $region36: #{tpu_custom_call.1} parent=5 // pred_fallthru
        _
      %p401 = scmp.le.s32.totalorder 2, %s11
      // Predicated region
      $region45: #{tpu_custom_call.1} parent=5 // pred_check
        %p402 = pneg %p401
      $region46: #{tpu_custom_call.1} parent=5 // pred_check_branch
        %404 = sbr.rel (%p402) target = $region48
      $region47: #{tpu_custom_call.1} parent=5 // pred_region
        %s405 = ssub.s32 %s11, 2
        // Predicated region
        $region49: #{tpu_custom_call.1} parent=47 // pred_check
          %p406 = pneg %p152
        $region50: #{tpu_custom_call.1} parent=47 // pred_check_branch
          %408 = sbr.rel (%p406) target = $region52
        $region51: #{tpu_custom_call.1} parent=47 // pred_region
          %s409 = sadd.s32 %s23, %s22
          %p410 = scmp.lt.s32.totalorder %s409, 1
          %s411 = scalar_select %p410, %s409, 1
          %s412 = smul.addr %s411, 8
          %s413 = scalar_lea.vmem %s4, %s412
        $region52: #{tpu_custom_call.1} parent=47 // pred_fallthru
          _
      $region48: #{tpu_custom_call.1} parent=5 // pred_fallthru
        _
    $region6: #{tpu_custom_call.1} parent=1 // loop_footer
      %s15 = sadd.s32 1, %s11
    $region7: #{tpu_custom_call.1} parent=1 // loop_footer_branch
      %10 = sbr.rel target = $region3
    $region8: #{tpu_custom_call.1} parent=1 // loop_exit
      _
    %414 = vsyncpa [#allocation3], 1
    %s415 = scalar_lea.sflag [#allocation3], 1
    %416 = vsyncpa %s415, 1

</llo_original>
